<compile_context>
chip_gen: v5e
topology: v5e:2x2
jax: 0.10.0
libtpu: 0.0.40
codegen_flags: <defaults>
</compile_context>

<pallas_src>
import functools

import jax
import jax.numpy as jnp
from jax.experimental import pallas as pl
from jax.experimental.pallas import tpu as pltpu

LN_EPS = 1e-5


def adapter_fusion_kernel(x_ref, w1_ref, b1_ref, w2_ref, b2_ref,
                          gamma_ref, beta_ref, o_ref, *, compute_dtype):
    # x tile: (TM, H).  w1: (H, Hd), w2: (Hd, H).  biases/affine: (1, .)
    x = x_ref[...].astype(jnp.float32)

    # adapter down-projection + ReLU  (Dropout == identity in eval mode)
    # matmul operands in `compute_dtype` (bf16 fast path on v6e/v7x MXU),
    # accumulation + everything elementwise stays f32.
    h = jnp.dot(x.astype(compute_dtype), w1_ref[...],
                preferred_element_type=jnp.float32) + b1_ref[...]
    h = jnp.maximum(h, 0.0)

    # adapter up-projection
    y = jnp.dot(h.astype(compute_dtype), w2_ref[...],
                preferred_element_type=jnp.float32) + b2_ref[...]

    # residual add
    z = x + y

    # LayerNorm over the hidden (lane) axis — reductions on XLU, rsqrt on EUP.
    mean = jnp.mean(z, axis=-1, keepdims=True)
    diff = z - mean
    var = jnp.mean(diff * diff, axis=-1, keepdims=True)
    inv = jax.lax.rsqrt(var + LN_EPS)
    out = diff * inv * gamma_ref[...] + beta_ref[...]

    o_ref[...] = out.astype(o_ref.dtype)


def adapter_fusion(x, w1, b1, w2, b2, gamma, beta, *,
                   block_rows=256, compute_dtype=jnp.float32):
    """x: (B, S, H) float32. Returns (B, S, H) float32."""
    B, S, H = x.shape
    Hd = w1.shape[1]          # hidden // 2
    M = B * S

    x2d = x.reshape(M, H).astype(jnp.float32)

    # Row-tile size: full slab if it is small, otherwise a sublane-aligned tile.
    if M <= block_rows:
        TM = M                                   # full-extent block is always legal
    else:
        TM = max(8, (block_rows // 8) * 8)       # keep (8, 128) tiling happy
    n_tiles = pl.cdiv(M, TM)
    Mp = n_tiles * TM
    if Mp != M:                                  # pad ragged tail with zero rows
        x2d = jnp.pad(x2d, ((0, Mp - M), (0, 0)))

    # Weights in the matmul compute dtype (halves weight DMA/VMEM when bf16);
    # biases / LN affine stay f32.
    w1c = w1.astype(compute_dtype)
    w2c = w2.astype(compute_dtype)
    b1_2d = b1.reshape(1, Hd).astype(jnp.float32)
    b2_2d = b2.reshape(1, H).astype(jnp.float32)
    g_2d = gamma.reshape(1, H).astype(jnp.float32)
    be_2d = beta.reshape(1, H).astype(jnp.float32)

    # Scoped-VMEM budget: double-buffered x/out tiles + resident weights + temps.
    w_item = jnp.dtype(compute_dtype).itemsize
    vmem_bytes = (
        2 * TM * H * 4                      # x tile, double-buffered
        + 2 * TM * H * 4                    # out tile, double-buffered
        + (H * Hd + Hd * H) * w_item        # resident weight matrices
        + (Hd + 3 * H) * 4                  # biases + LN affine
        + TM * (Hd + 2 * H) * 4             # in-kernel intermediates (h, z, out)
        + (2 << 20)                         # headroom
    )
    vmem_limit = int(min(max(vmem_bytes, 16 << 20), 64 << 20))

    cost = pl.CostEstimate(
        flops=4 * Mp * H * Hd,                              # two matmuls
        transcendentals=Mp,                                  # rsqrt per row
        bytes_accessed=4 * 2 * Mp * H + 2 * w_item * H * Hd,
    )

    kernel = functools.partial(adapter_fusion_kernel, compute_dtype=compute_dtype)

    out2d = pl.pallas_call(
        kernel,
        out_shape=jax.ShapeDtypeStruct((Mp, H), jnp.float32),
        grid=(n_tiles,),
        in_specs=[
            pl.BlockSpec((TM, H), lambda i: (i, 0)),    # x: streamed row tiles
            pl.BlockSpec((H, Hd), lambda i: (0, 0)),    # w1: VMEM-resident
            pl.BlockSpec((1, Hd), lambda i: (0, 0)),    # b1
            pl.BlockSpec((Hd, H), lambda i: (0, 0)),    # w2: VMEM-resident
            pl.BlockSpec((1, H), lambda i: (0, 0)),     # b2
            pl.BlockSpec((1, H), lambda i: (0, 0)),     # gamma
            pl.BlockSpec((1, H), lambda i: (0, 0)),     # beta
        ],
        out_specs=pl.BlockSpec((TM, H), lambda i: (i, 0)),
        compiler_params=pltpu.CompilerParams(
            dimension_semantics=("parallel",),          # rows independent; megacore-shardable
            vmem_limit_bytes=vmem_limit,
        ),
        cost_estimate=cost,
    )(x2d, w1c, b1_2d, w2c, b2_2d, g_2d, be_2d)

    return out2d[:M].reshape(B, S, H)


def reference(x, w1, b1, w2, b2, gamma, beta):
    h = jnp.maximum(x @ w1 + b1, 0.0)
    y = h @ w2 + b2
    z = x + y
    mean = jnp.mean(z, axis=-1, keepdims=True)
    var = jnp.mean((z - mean) ** 2, axis=-1, keepdims=True)
    return (z - mean) * jax.lax.rsqrt(var + LN_EPS) * gamma + beta


if __name__ == "__main__":
    # Small demo shapes, consistent with the module defaults (hidden_dim = 512,
    # adapter bottleneck = 256) and lane-dense (H, Hd multiples of 128).
    B, S, H = 2, 16, 512
    Hd = H // 2

    key = jax.random.PRNGKey(0)
    kx, k1, k2, k3, k4 = jax.random.split(key, 5)

    x = jax.random.normal(kx, (B, S, H), dtype=jnp.float32)

    # deterministic parameter init (shapes per nn.Linear / nn.LayerNorm)
    bound1 = 1.0 / (H ** 0.5)
    w1 = jax.random.uniform(k1, (H, Hd), jnp.float32, -bound1, bound1)
    b1 = jax.random.uniform(k2, (Hd,), jnp.float32, -bound1, bound1)
    bound2 = 1.0 / (Hd ** 0.5)
    w2 = jax.random.uniform(k3, (Hd, H), jnp.float32, -bound2, bound2)
    b2 = jax.random.uniform(k4, (H,), jnp.float32, -bound2, bound2)
    gamma = jnp.ones((H,), jnp.float32)
    beta = jnp.zeros((H,), jnp.float32)

    ref = reference(x, w1, b1, w2, b2, gamma, beta)

    # f32 MXU path (bit-faithful to the PyTorch eval forward); block_rows=16
    # exercises the multi-tile pipelined grid at these small demo shapes.
    out = adapter_fusion(x, w1, b1, w2, b2, gamma, beta, block_rows=16)
    out = jax.block_until_ready(out)
    assert out.shape == (B, S, H)
    assert jnp.allclose(out, ref, atol=1e-5, rtol=1e-5), "f32 kernel mismatch vs reference"

    # bf16 MXU-operand fast path (v6e/v7x): f32 accumulate + f32 residual/LayerNorm.
    out_bf16 = adapter_fusion(x, w1, b1, w2, b2, gamma, beta,
                              block_rows=16, compute_dtype=jnp.bfloat16)
    out_bf16 = jax.block_until_ready(out_bf16)
    assert jnp.allclose(out_bf16, ref, atol=5e-2, rtol=0.0), "bf16 kernel outside tolerance"

    print("KERNEL_OK")
</pallas_src>

<mosaic_0001>
module attributes {stable_mosaic.version = 11 : i64} {
  func.func @adapter_fusion_kernel(%arg0: i32, %arg1: memref<16x512xf32, #tpu.memory_space<vmem>>, %arg2: memref<512x256xf32, #tpu.memory_space<vmem>>, %arg3: memref<1x256xf32, #tpu.memory_space<vmem>>, %arg4: memref<256x512xf32, #tpu.memory_space<vmem>>, %arg5: memref<1x512xf32, #tpu.memory_space<vmem>>, %arg6: memref<1x512xf32, #tpu.memory_space<vmem>>, %arg7: memref<1x512xf32, #tpu.memory_space<vmem>>, %arg8: memref<16x512xf32, #tpu.memory_space<vmem>>) attributes {dimension_semantics = [#tpu.dimension_semantics<parallel>], iteration_bounds = array<i64: 2>, scalar_prefetch = 0 : i64, scratch_operands = 0 : i64, tpu.core_type = #tpu.core_type<tc>, window_params = [{transform_indices = @transform_0, window_bounds = array<i64: 16, 512>}, {pipeline_mode = #tpu.pipeline_mode<synchronous>, transform_indices = @transform_1, window_bounds = array<i64: 512, 256>}, {pipeline_mode = #tpu.pipeline_mode<synchronous>, transform_indices = @transform_2, window_bounds = array<i64: 1, 256>}, {pipeline_mode = #tpu.pipeline_mode<synchronous>, transform_indices = @transform_3, window_bounds = array<i64: 256, 512>}, {pipeline_mode = #tpu.pipeline_mode<synchronous>, transform_indices = @transform_4, window_bounds = array<i64: 1, 512>}, {pipeline_mode = #tpu.pipeline_mode<synchronous>, transform_indices = @transform_5, window_bounds = array<i64: 1, 512>}, {pipeline_mode = #tpu.pipeline_mode<synchronous>, transform_indices = @transform_6, window_bounds = array<i64: 1, 512>}, {transform_indices = @transform_7, window_bounds = array<i64: 16, 512>}]} {
    %c0 = arith.constant 0 : index
    %c0_0 = arith.constant 0 : index
    %0 = vector.load %arg1[%c0, %c0_0] : memref<16x512xf32, #tpu.memory_space<vmem>>, vector<16x512xf32>
    %c0_1 = arith.constant 0 : index
    %c0_2 = arith.constant 0 : index
    %1 = vector.load %arg2[%c0_1, %c0_2] : memref<512x256xf32, #tpu.memory_space<vmem>>, vector<512x256xf32>
    %cst = arith.constant dense<0.000000e+00> : vector<16x256xf32>
    %2 = tpu.matmul %0, %1, %cst {dimension_numbers = #tpu.dot_dimension_numbers<[1], [0], [0], [1], [0, 0, 1, 1], [], []>} : vector<16x512xf32>, vector<512x256xf32>, vector<16x256xf32> -> vector<16x256xf32>
    %c0_3 = arith.constant 0 : index
    %c0_4 = arith.constant 0 : index
    %3 = vector.load %arg3[%c0_3, %c0_4] : memref<1x256xf32, #tpu.memory_space<vmem>>, vector<1x256xf32>
    %4 = vector.broadcast %3 : vector<1x256xf32> to vector<16x256xf32>
    %5 = arith.addf %2, %4 : vector<16x256xf32>
    %cst_5 = arith.constant 0.000000e+00 : f32
    %6 = vector.broadcast %cst_5 : f32 to vector<16x256xf32>
    %7 = arith.maximumf %5, %6 : vector<16x256xf32>
    %c0_6 = arith.constant 0 : index
    %c0_7 = arith.constant 0 : index
    %8 = vector.load %arg4[%c0_6, %c0_7] : memref<256x512xf32, #tpu.memory_space<vmem>>, vector<256x512xf32>
    %cst_8 = arith.constant dense<0.000000e+00> : vector<16x512xf32>
    %9 = tpu.matmul %7, %8, %cst_8 {dimension_numbers = #tpu.dot_dimension_numbers<[1], [0], [0], [1], [0, 0, 1, 1], [], []>} : vector<16x256xf32>, vector<256x512xf32>, vector<16x512xf32> -> vector<16x512xf32>
    %c0_9 = arith.constant 0 : index
    %c0_10 = arith.constant 0 : index
    %10 = vector.load %arg5[%c0_9, %c0_10] : memref<1x512xf32, #tpu.memory_space<vmem>>, vector<1x512xf32>
    %11 = vector.broadcast %10 : vector<1x512xf32> to vector<16x512xf32>
    %12 = arith.addf %9, %11 : vector<16x512xf32>
    %13 = arith.addf %0, %12 : vector<16x512xf32>
    %cst_11 = arith.constant dense<0.000000e+00> : vector<16xf32>
    %14 = vector.multi_reduction <add>, %13, %cst_11 [1] : vector<16x512xf32> to vector<16xf32>
    %15 = vector.shape_cast %14 : vector<16xf32> to vector<16x1xf32>
    %cst_12 = arith.constant 5.120000e+02 : f32
    %16 = vector.broadcast %cst_12 : f32 to vector<16x1xf32>
    %17 = arith.divf %15, %16 : vector<16x1xf32>
    %18 = vector.broadcast %17 : vector<16x1xf32> to vector<16x512xf32>
    %19 = arith.subf %13, %18 : vector<16x512xf32>
    %20 = arith.mulf %19, %19 : vector<16x512xf32>
    %cst_13 = arith.constant dense<0.000000e+00> : vector<16xf32>
    %21 = vector.multi_reduction <add>, %20, %cst_13 [1] : vector<16x512xf32> to vector<16xf32>
    %22 = vector.shape_cast %21 : vector<16xf32> to vector<16x1xf32>
    %cst_14 = arith.constant 5.120000e+02 : f32
    %23 = vector.broadcast %cst_14 : f32 to vector<16x1xf32>
    %24 = arith.divf %22, %23 : vector<16x1xf32>
    %cst_15 = arith.constant 9.99999974E-6 : f32
    %25 = vector.broadcast %cst_15 : f32 to vector<16x1xf32>
    %26 = arith.addf %24, %25 : vector<16x1xf32>
    %27 = math.rsqrt %26 : vector<16x1xf32>
    %28 = vector.broadcast %27 : vector<16x1xf32> to vector<16x512xf32>
    %29 = arith.mulf %19, %28 : vector<16x512xf32>
    %c0_16 = arith.constant 0 : index
    %c0_17 = arith.constant 0 : index
    %30 = vector.load %arg6[%c0_16, %c0_17] : memref<1x512xf32, #tpu.memory_space<vmem>>, vector<1x512xf32>
    %31 = vector.broadcast %30 : vector<1x512xf32> to vector<16x512xf32>
    %32 = arith.mulf %29, %31 : vector<16x512xf32>
    %c0_18 = arith.constant 0 : index
    %c0_19 = arith.constant 0 : index
    %33 = vector.load %arg7[%c0_18, %c0_19] : memref<1x512xf32, #tpu.memory_space<vmem>>, vector<1x512xf32>
    %34 = vector.broadcast %33 : vector<1x512xf32> to vector<16x512xf32>
    %35 = arith.addf %32, %34 : vector<16x512xf32>
    %c0_20 = arith.constant 0 : index
    %c0_21 = arith.constant 0 : index
    %36 = vector.load %arg8[%c0_20, %c0_21] : memref<16x512xf32, #tpu.memory_space<vmem>>, vector<16x512xf32>
    tpu.vector_store %arg8[%c0_20, %c0_21], %35 {strides = array<i32>} : memref<16x512xf32, #tpu.memory_space<vmem>>, vector<16x512xf32>,
    return
  }
  func.func @transform_0(%arg0: i32) -> (i32, i32) {
    %c0_i32 = arith.constant 0 : i32
    %c0_i32_0 = arith.constant 0 : i32
    return %arg0, %c0_i32 : i32, i32
  }
  func.func @transform_1(%arg0: i32) -> (i32, i32) {
    %c0_i32 = arith.constant 0 : i32
    %c0_i32_0 = arith.constant 0 : i32
    %c0_i32_1 = arith.constant 0 : i32
    return %c0_i32, %c0_i32_0 : i32, i32
  }
  func.func @transform_2(%arg0: i32) -> (i32, i32) {
    %c0_i32 = arith.constant 0 : i32
    %c0_i32_0 = arith.constant 0 : i32
    %c0_i32_1 = arith.constant 0 : i32
    return %c0_i32, %c0_i32_0 : i32, i32
  }
  func.func @transform_3(%arg0: i32) -> (i32, i32) {
    %c0_i32 = arith.constant 0 : i32
    %c0_i32_0 = arith.constant 0 : i32
    %c0_i32_1 = arith.constant 0 : i32
    return %c0_i32, %c0_i32_0 : i32, i32
  }
  func.func @transform_4(%arg0: i32) -> (i32, i32) {
    %c0_i32 = arith.constant 0 : i32
    %c0_i32_0 = arith.constant 0 : i32
    %c0_i32_1 = arith.constant 0 : i32
    return %c0_i32, %c0_i32_0 : i32, i32
  }
  func.func @transform_5(%arg0: i32) -> (i32, i32) {
    %c0_i32 = arith.constant 0 : i32
    %c0_i32_0 = arith.constant 0 : i32
    %c0_i32_1 = arith.constant 0 : i32
    return %c0_i32, %c0_i32_0 : i32, i32
  }
  func.func @transform_6(%arg0: i32) -> (i32, i32) {
    %c0_i32 = arith.constant 0 : i32
    %c0_i32_0 = arith.constant 0 : i32
    %c0_i32_1 = arith.constant 0 : i32
    return %c0_i32, %c0_i32_0 : i32, i32
  }
  func.func @transform_7(%arg0: i32) -> (i32, i32) {
    %c0_i32 = arith.constant 0 : i32
    %c0_i32_0 = arith.constant 0 : i32
    return %arg0, %c0_i32 : i32, i32
  }
}

</mosaic_0001>

<llo_original>
// kernel: tpu_custom_call.1
$region0: #{tpu_custom_call.1}
  #allocation0 [shape = 'u32[]', space=smem, size = 0x4, offset = 0x4, fixed_abs, tag = 'smem constant byte address 0x4 - core index']
  #allocation1 [shape = 'u32[72,128]{1,0:T(1,128)}', space=vmem, size = 0x9000, scoped, tag = 'internal scratch']
  %s0 = inlined_call_operand.hbm [shape: f32[32,512], index: 0, kind: input, shape index: {}]
  %s1 = inlined_call_operand.hbm [shape: f32[512,256], index: 1, kind: input, shape index: {}]
  %s2 = inlined_call_operand.hbm [shape: f32[1,256], index: 2, kind: input, shape index: {}]
  %s3 = inlined_call_operand.hbm [shape: f32[256,512], index: 3, kind: input, shape index: {}]
  %s4 = inlined_call_operand.hbm [shape: f32[1,512], index: 4, kind: input, shape index: {}]
  %s5 = inlined_call_operand.vmem [shape: f32[1,512], index: 5, kind: input, shape index: {}]
  %s6 = inlined_call_operand.hbm [shape: f32[1,512], index: 6, kind: input, shape index: {}]
  %s7 = inlined_call_operand.hbm [shape: f32[32,512], index: 7, kind: output, shape index: {}]
  %s8 = sld [smem:[#allocation0]]
  $region85: #{tpu_custom_call.1} parent=0
    _
  %s10 = ssub.s32 1, %s8
  %s11 = scalar_select 0, %s10, %s8
  $region1: #{tpu_custom_call.1} parent=0
    #allocation2 [shape = 'u8[65536]{0}', space=vmem, size = 0x10000, scoped, tag = 'input window, operand 0']
    #allocation3 [shape = 's32[2]{0}', space=sflag, size = 0x8, scoped, tag = 'scoped memory for tpu_custom_call.1']
    #allocation4 [shape = 's32[2]{0}', space=sflag, size = 0x8, scoped, tag = 'scoped memory for tpu_custom_call.1']
    #allocation5 [shape = 'u8[524288]{0}', space=vmem, size = 0x80000, scoped, tag = 'input window, operand 1, single buffered']
    #allocation6 [shape = 's32[1]{0}', space=sflag, size = 0x4, scoped, tag = 'scoped memory for tpu_custom_call.1']
    #allocation7 [shape = 'u8[1024]{0}', space=vmem, size = 0x400, scoped, tag = 'input window, operand 2, single buffered']
    #allocation8 [shape = 'u8[524288]{0}', space=vmem, size = 0x80000, scoped, tag = 'input window, operand 3, single buffered']
    #allocation9 [shape = 's32[1]{0}', space=sflag, size = 0x4, scoped, tag = 'scoped memory for tpu_custom_call.1']
    #allocation10 [shape = 'u8[2048]{0}', space=vmem, size = 0x800, scoped, tag = 'input window, operand 4, single buffered']
    #allocation11 [shape = 'u8[2048]{0}', space=vmem, size = 0x800, scoped, tag = 'input window, operand 6, single buffered']
    #allocation12 [shape = 's32[1]{0}', space=sflag, size = 0x4, scoped, tag = 'scoped memory for tpu_custom_call.1']
    #allocation13 [shape = 'u8[65536]{0}', space=vmem, size = 0x10000, scoped, tag = 'output window, operand 0']
    %12 = vsyncpa [#allocation3], 0
    %s13 = scalar_lea.sflag [#allocation3], 1
    %14 = vsyncpa %s13, 0
    %15 = vsyncpa [#allocation6], 0
    %16 = vsyncpa [#allocation9], 0
    %17 = vsyncpa [#allocation12], 0
    %18 = vsyncpa [#allocation4], 0
    %s19 = scalar_lea.sflag [#allocation4], 1
    %20 = vsyncpa %s19, 0
    loop: start=0, step=1, limit=4
    $region2: #{tpu_custom_call.1} parent=1 // loop_pre_header
      _
    $region3: #{tpu_custom_call.1} parent=1 // loop_header
      %s22 = sphi 0, %s26
      %p23 = scmp.ge.s32.totalorder %s22, 4
      %s32 = sphi 0, %s34
      %s35 = sphi 0, %s32
      %s36 = sphi 0, %s35
      %s52 = sphi 0, %s36
      %s56 = sphi 0, %s56
      %s58 = sphi 0, %s56
      %s59 = sphi 0, %s58
      %s73 = sphi 0, %s59
      %s77 = sphi 0, %s77
      %s79 = sphi 0, %s77
      %s80 = sphi 0, %s79
      %s94 = sphi 0, %s80
      %s98 = sphi 0, %s98
      %s100 = sphi 0, %s98
      %s101 = sphi 0, %s100
      %s115 = sphi 0, %s101
      %s119 = sphi 0, %s119
      %s121 = sphi 0, %s119
      %s122 = sphi 0, %s121
      %s136 = sphi 0, %s122
      %s140 = sphi 0, %s140
      %s142 = sphi 0, %s140
      %s143 = sphi 0, %s142
      %s157 = sphi 0, %s143
      %s161 = sphi 0, %s161
      %s163 = sphi 0, %s161
      %s164 = sphi 0, %s163
      %s178 = sphi 0, %s164
      %s184 = sphi 0, %s186
      %s187 = sphi 0, %s184
      %s188 = sphi 0, %s187
      %s204 = sphi 0, %s188
    $region4: #{tpu_custom_call.1} parent=1 // loop_header_branch
      %25 = sbr.rel (%p23) target = $region8
    $region5: #{tpu_custom_call.1} parent=1 // loop_body
      %s27 = ssub.s32 %s22, 1
      %s28 = ssub.s32 %s22, 2
      %s29 = sadd.s32 %s22, 1
      %s30 = ssub.s32 %s22, %s29
      %p31 = scmp.eq.s32.totalorder %s30, 0
      %s33 = sadd.s32 %s32, 1
      %s34 = scalar_select %p31, %s32, %s33
      %p37 = pneg %p31
      %p38 = scmp.eq.s32.totalorder %s22, 1
      %p39 = por %p37, %p38
      %p40 = scmp.ne.s32.totalorder %s32, %s35
      %p41 = scmp.eq.s32.totalorder %s22, 0
      %p42 = por %p40, %p41
      %p43 = scmp.ne.s32.totalorder %s32, %s35
      %p44 = scmp.eq.s32.totalorder %s27, 1
      %p45 = por %p43, %p44
      %p46 = scmp.ne.s32.totalorder %s35, %s36
      %p47 = scmp.eq.s32.totalorder %s27, 0
      %p48 = por %p46, %p47
      %p49 = scmp.ne.s32.totalorder %s35, %s36
      %p50 = scmp.eq.s32.totalorder %s28, 1
      %p51 = por %p49, %p50
      %p53 = scmp.ne.s32.totalorder %s36, %s52
      %p54 = scmp.eq.s32.totalorder %s28, 0
      %p55 = por %p53, %p54
      %s57 = sadd.s32 %s56, 1
      %p60 = scmp.eq.s32.totalorder %s22, 1
      %p61 = scmp.ne.s32.totalorder %s56, %s58
      %p62 = scmp.eq.s32.totalorder %s22, 0
      %p63 = por %p61, %p62
      %p64 = scmp.ne.s32.totalorder %s56, %s58
      %p65 = scmp.eq.s32.totalorder %s27, 1
      %p66 = por %p64, %p65
      %p67 = scmp.ne.s32.totalorder %s58, %s59
      %p68 = scmp.eq.s32.totalorder %s27, 0
      %p69 = por %p67, %p68
      %p70 = scmp.ne.s32.totalorder %s58, %s59
      %p71 = scmp.eq.s32.totalorder %s28, 1
      %p72 = por %p70, %p71
      %p74 = scmp.ne.s32.totalorder %s59, %s73
      %p75 = scmp.eq.s32.totalorder %s28, 0
      %p76 = por %p74, %p75
      %s78 = sadd.s32 %s77, 1
      %p81 = scmp.eq.s32.totalorder %s22, 1
      %p82 = scmp.ne.s32.totalorder %s77, %s79
      %p83 = scmp.eq.s32.totalorder %s22, 0
      %p84 = por %p82, %p83
      %p85 = scmp.ne.s32.totalorder %s77, %s79
      %p86 = scmp.eq.s32.totalorder %s27, 1
      %p87 = por %p85, %p86
      %p88 = scmp.ne.s32.totalorder %s79, %s80
      %p89 = scmp.eq.s32.totalorder %s27, 0
      %p90 = por %p88, %p89
      %p91 = scmp.ne.s32.totalorder %s79, %s80
      %p92 = scmp.eq.s32.totalorder %s28, 1
      %p93 = por %p91, %p92
      %p95 = scmp.ne.s32.totalorder %s80, %s94
      %p96 = scmp.eq.s32.totalorder %s28, 0
      %p97 = por %p95, %p96
      %s99 = sadd.s32 %s98, 1
      %p102 = scmp.eq.s32.totalorder %s22, 1
      %p103 = scmp.ne.s32.totalorder %s98, %s100
      %p104 = scmp.eq.s32.totalorder %s22, 0
      %p105 = por %p103, %p104
      %p106 = scmp.ne.s32.totalorder %s98, %s100
      %p107 = scmp.eq.s32.totalorder %s27, 1
      %p108 = por %p106, %p107
      %p109 = scmp.ne.s32.totalorder %s100, %s101
      %p110 = scmp.eq.s32.totalorder %s27, 0
      %p111 = por %p109, %p110
      %p112 = scmp.ne.s32.totalorder %s100, %s101
      %p113 = scmp.eq.s32.totalorder %s28, 1
      %p114 = por %p112, %p113
      %p116 = scmp.ne.s32.totalorder %s101, %s115
      %p117 = scmp.eq.s32.totalorder %s28, 0
      %p118 = por %p116, %p117
      %s120 = sadd.s32 %s119, 1
      %p123 = scmp.eq.s32.totalorder %s22, 1
      %p124 = scmp.ne.s32.totalorder %s119, %s121
      %p125 = scmp.eq.s32.totalorder %s22, 0
      %p126 = por %p124, %p125
      %p127 = scmp.ne.s32.totalorder %s119, %s121
      %p128 = scmp.eq.s32.totalorder %s27, 1
      %p129 = por %p127, %p128
      %p130 = scmp.ne.s32.totalorder %s121, %s122
      %p131 = scmp.eq.s32.totalorder %s27, 0
      %p132 = por %p130, %p131
      %p133 = scmp.ne.s32.totalorder %s121, %s122
      %p134 = scmp.eq.s32.totalorder %s28, 1
      %p135 = por %p133, %p134
      %p137 = scmp.ne.s32.totalorder %s122, %s136
      %p138 = scmp.eq.s32.totalorder %s28, 0
      %p139 = por %p137, %p138
      %s141 = sadd.s32 %s140, 1
      %p144 = scmp.eq.s32.totalorder %s22, 1
      %p145 = scmp.ne.s32.totalorder %s140, %s142
      %p146 = scmp.eq.s32.totalorder %s22, 0
      %p147 = por %p145, %p146
      %p148 = scmp.ne.s32.totalorder %s140, %s142
      %p149 = scmp.eq.s32.totalorder %s27, 1
      %p150 = por %p148, %p149
      %p151 = scmp.ne.s32.totalorder %s142, %s143
      %p152 = scmp.eq.s32.totalorder %s27, 0
      %p153 = por %p151, %p152
      %p154 = scmp.ne.s32.totalorder %s142, %s143
      %p155 = scmp.eq.s32.totalorder %s28, 1
      %p156 = por %p154, %p155
      %p158 = scmp.ne.s32.totalorder %s143, %s157
      %p159 = scmp.eq.s32.totalorder %s28, 0
      %p160 = por %p158, %p159
      %s162 = sadd.s32 %s161, 1
      %p165 = scmp.eq.s32.totalorder %s22, 1
      %p166 = scmp.ne.s32.totalorder %s161, %s163
      %p167 = scmp.eq.s32.totalorder %s22, 0
      %p168 = por %p166, %p167
      %p169 = scmp.ne.s32.totalorder %s161, %s163
      %p170 = scmp.eq.s32.totalorder %s27, 1
      %p171 = por %p169, %p170
      %p172 = scmp.ne.s32.totalorder %s163, %s164
      %p173 = scmp.eq.s32.totalorder %s27, 0
      %p174 = por %p172, %p173
      %p175 = scmp.ne.s32.totalorder %s163, %s164
      %p176 = scmp.eq.s32.totalorder %s28, 1
      %p177 = por %p175, %p176
      %p179 = scmp.ne.s32.totalorder %s164, %s178
      %p180 = scmp.eq.s32.totalorder %s28, 0
      %p181 = por %p179, %p180
      %s182 = ssub.s32 %s22, %s29
      %p183 = scmp.eq.s32.totalorder %s182, 0
      %s185 = sadd.s32 %s184, 1
      %s186 = scalar_select %p183, %s184, %s185
      %p189 = pneg %p183
      %p190 = scmp.eq.s32.totalorder %s22, 1
      %p191 = por %p189, %p190
      %p192 = scmp.ne.s32.totalorder %s184, %s187
      %p193 = scmp.eq.s32.totalorder %s22, 0
      %p194 = por %p192, %p193
      %p195 = scmp.ne.s32.totalorder %s184, %s187
      %p196 = scmp.eq.s32.totalorder %s27, 1
      %p197 = por %p195, %p196
      %p198 = scmp.ne.s32.totalorder %s187, %s188
      %p199 = scmp.eq.s32.totalorder %s27, 0
      %p200 = por %p198, %p199
      %p201 = scmp.ne.s32.totalorder %s187, %s188
      %p202 = scmp.eq.s32.totalorder %s28, 1
      %p203 = por %p201, %p202
      %p205 = scmp.ne.s32.totalorder %s188, %s204
      %p206 = scmp.eq.s32.totalorder %s28, 0
      %p207 = por %p205, %p206
      %p208 = scmp.le.s32.totalorder 1, %s22
      %p209 = scmp.lt.s32.totalorder %s22, 3
      %p210 = pnand %p208, %p209
      %p211 = pneg %p210
      // Predicated region
      $region9: #{tpu_custom_call.1} parent=5 // pred_check
        _
      $region10: #{tpu_custom_call.1} parent=5 // pred_check_branch
        %213 = sbr.rel (%p210) target = $region12
      $region11: #{tpu_custom_call.1} parent=5 // pred_region
        %s214 = ssub.s32 %s22, 1
        // Predicated region
        $region13: #{tpu_custom_call.1} parent=11 // pred_check
          %p215 = pneg %p69
        $region14: #{tpu_custom_call.1} parent=11 // pred_check_branch
          %217 = sbr.rel (%p215) target = $region16
        $region15: #{tpu_custom_call.1} parent=11 // pred_region
          %219 = vsyncadd [#allocation6], 0
          %s220 = sshll.u32 %s1, 4
          %s221 = int_to_ptr.hbm [resolvable:$true] %s220
          %s222 = sshll.u32 [#allocation5], 4
          %s223 = int_to_ptr.vmem [resolvable:$true] %s222
          %228 = dma.hbm_to_vmem [thread:$0]  %s221, 16384, %s223, [#allocation6], 256, 256, 16
        $region16: #{tpu_custom_call.1} parent=11 // pred_fallthru
          _
        // Predicated region
        $region17: #{tpu_custom_call.1} parent=11 // pred_check
          %p229 = pneg %p90
        $region18: #{tpu_custom_call.1} parent=11 // pred_check_branch
          %231 = sbr.rel (%p229) target = $region20
        $region19: #{tpu_custom_call.1} parent=11 // pred_region
          %233 = vsyncadd [#allocation6], 0
          %s235 = sshll.u32 %s2, 4
          %s236 = int_to_ptr.hbm [resolvable:$true] %s235
          %s237 = sshll.u32 [#allocation7], 4
          %s238 = int_to_ptr.vmem [resolvable:$true] %s237
          %240 = dma.hbm_to_vmem [thread:$0]  %s236, 32, %s238, [#allocation6]
        $region20: #{tpu_custom_call.1} parent=11 // pred_fallthru
          _
        // Predicated region
        $region21: #{tpu_custom_call.1} parent=11 // pred_check
          %p241 = pneg %p111
        $region22: #{tpu_custom_call.1} parent=11 // pred_check_branch
          %243 = sbr.rel (%p241) target = $region24
        $region23: #{tpu_custom_call.1} parent=11 // pred_region
          %245 = vsyncadd [#allocation9], 0
          %s246 = sshll.u32 %s3, 4
          %s247 = int_to_ptr.hbm [resolvable:$true] %s246
          %s248 = sshll.u32 [#allocation8], 4
          %s249 = int_to_ptr.vmem [resolvable:$true] %s248
          %254 = dma.hbm_to_vmem [thread:$0]  %s247, 16384, %s249, [#allocation9], 512, 512, 32
        $region24: #{tpu_custom_call.1} parent=11 // pred_fallthru
          _
        // Predicated region
        $region25: #{tpu_custom_call.1} parent=11 // pred_check
          %p255 = pneg %p132
        $region26: #{tpu_custom_call.1} parent=11 // pred_check_branch
          %257 = sbr.rel (%p255) target = $region28
        $region27: #{tpu_custom_call.1} parent=11 // pred_region
          %259 = vsyncadd [#allocation9], 0
          %s261 = sshll.u32 %s4, 4
          %s262 = int_to_ptr.hbm [resolvable:$true] %s261
          %s263 = sshll.u32 [#allocation10], 4
          %s264 = int_to_ptr.vmem [resolvable:$true] %s263
          %266 = dma.hbm_to_vmem [thread:$0]  %s262, 64, %s264, [#allocation9]
        $region28: #{tpu_custom_call.1} parent=11 // pred_fallthru
          _
        // Predicated region
        $region29: #{tpu_custom_call.1} parent=11 // pred_check
          %p267 = pneg %p153
        $region30: #{tpu_custom_call.1} parent=11 // pred_check_branch
          %269 = sbr.rel (%p267) target = $region32
        $region31: #{tpu_custom_call.1} parent=11 // pred_region
          _
        $region32: #{tpu_custom_call.1} parent=11 // pred_fallthru
          _
        // Predicated region
        $region33: #{tpu_custom_call.1} parent=11 // pred_check
          %p270 = pneg %p174
        $region34: #{tpu_custom_call.1} parent=11 // pred_check_branch
          %272 = sbr.rel (%p270) target = $region36
        $region35: #{tpu_custom_call.1} parent=11 // pred_region
          %274 = vsyncadd [#allocation12], 0
          %s276 = sshll.u32 %s6, 4
          %s277 = int_to_ptr.hbm [resolvable:$true] %s276
          %s278 = sshll.u32 [#allocation11], 4
          %s279 = int_to_ptr.vmem [resolvable:$true] %s278
          %281 = dma.hbm_to_vmem [thread:$0]  %s277, 64, %s279, [#allocation12]
        $region36: #{tpu_custom_call.1} parent=11 // pred_fallthru
          _
      $region12: #{tpu_custom_call.1} parent=5 // pred_fallthru
        _
      %p282 = scmp.lt.s32.totalorder %s22, 2
      // Predicated region
      $region37: #{tpu_custom_call.1} parent=5 // pred_check
        %p283 = pneg %p282
      $region38: #{tpu_custom_call.1} parent=5 // pred_check_branch
        %285 = sbr.rel (%p283) target = $region40
      $region39: #{tpu_custom_call.1} parent=5 // pred_region
        // Predicated region
        $region41: #{tpu_custom_call.1} parent=39 // pred_check
          %p286 = pneg %p42
        $region42: #{tpu_custom_call.1} parent=39 // pred_check_branch
          %288 = sbr.rel (%p286) target = $region44
        $region43: #{tpu_custom_call.1} parent=39 // pred_region
          %s289 = sand.u32 %s32, 1
          %s290 = scalar_lea.sflag [#allocation3], %s289
          %s291 = sand.u32 %s32, 1
          %s292 = smul.addr %s291, 64
          %s293 = scalar_lea.vmem [#allocation2], %s292
          %s294 = smul.u32 2, %s22
          %296 = vsyncadd %s290, 0
          %s297 = smul.addr %s294, 4
          %s298 = smul.addr %s297, 8
          %s299 = scalar_lea.hbm %s0, %s298
          %s300 = sshll.u32 %s299, 4
          %s301 = int_to_ptr.hbm [resolvable:$true] %s300
          %s302 = sshll.u32 %s293, 4
          %s303 = int_to_ptr.vmem [resolvable:$true] %s302
          %308 = dma.hbm_to_vmem [thread:$0]  %s301, 1024, %s303, %s290, 512, 512, 32
        $region44: #{tpu_custom_call.1} parent=39 // pred_fallthru
          _
      $region40: #{tpu_custom_call.1} parent=5 // pred_fallthru
        _
      %p309 = scmp.le.s32.totalorder 1, %s22
      %p310 = scmp.lt.s32.totalorder %s22, 3
      %p311 = pnand %p309, %p310
      %p312 = pneg %p311
      // Predicated region
      $region45: #{tpu_custom_call.1} parent=5 // pred_check
        _
      $region46: #{tpu_custom_call.1} parent=5 // pred_check_branch
        %314 = sbr.rel (%p311) target = $region48
      $region47: #{tpu_custom_call.1} parent=5 // pred_region
        %s315 = ssub.s32 %s22, 1
        %s316 = sand.u32 %s35, 1
        %s317 = scalar_lea.sflag [#allocation3], %s316
        %s318 = sand.u32 %s35, 1
        %s319 = smul.addr %s318, 64
        %s320 = scalar_lea.vmem [#allocation2], %s319
        // Predicated region
        $region49: #{tpu_custom_call.1} parent=47 // pred_check
          %p321 = pneg %p48
        $region50: #{tpu_custom_call.1} parent=47 // pred_check_branch
          %323 = sbr.rel (%p321) target = $region52
        $region51: #{tpu_custom_call.1} parent=47 // pred_region
          %325 = dma.done %s317, 1024
        $region52: #{tpu_custom_call.1} parent=47 // pred_fallthru
          _
        // Predicated region
        $region53: #{tpu_custom_call.1} parent=47 // pred_check
          %p326 = pneg %p69
        $region54: #{tpu_custom_call.1} parent=47 // pred_check_branch
          %328 = sbr.rel (%p326) target = $region56
        $region55: #{tpu_custom_call.1} parent=47 // pred_region
          %330 = dma.done [#allocation6], 16384
        $region56: #{tpu_custom_call.1} parent=47 // pred_fallthru
          _
        // Predicated region
        $region57: #{tpu_custom_call.1} parent=47 // pred_check
          %p331 = pneg %p90
        $region58: #{tpu_custom_call.1} parent=47 // pred_check_branch
          %333 = sbr.rel (%p331) target = $region60
        $region59: #{tpu_custom_call.1} parent=47 // pred_region
          %335 = dma.done [#allocation6], 32
        $region60: #{tpu_custom_call.1} parent=47 // pred_fallthru
          _
        // Predicated region
        $region61: #{tpu_custom_call.1} parent=47 // pred_check
          %p336 = pneg %p111
        $region62: #{tpu_custom_call.1} parent=47 // pred_check_branch
          %338 = sbr.rel (%p336) target = $region64
        $region63: #{tpu_custom_call.1} parent=47 // pred_region
          %340 = dma.done [#allocation9], 16384
        $region64: #{tpu_custom_call.1} parent=47 // pred_fallthru
          _
        // Predicated region
        $region65: #{tpu_custom_call.1} parent=47 // pred_check
          %p341 = pneg %p132
        $region66: #{tpu_custom_call.1} parent=47 // pred_check_branch
          %343 = sbr.rel (%p341) target = $region68
        $region67: #{tpu_custom_call.1} parent=47 // pred_region
          %345 = dma.done [#allocation9], 64
        $region68: #{tpu_custom_call.1} parent=47 // pred_fallthru
          _
        // Predicated region
        $region69: #{tpu_custom_call.1} parent=47 // pred_check
          %p346 = pneg %p174
        $region70: #{tpu_custom_call.1} parent=47 // pred_check_branch
          %348 = sbr.rel (%p346) target = $region72
        $region71: #{tpu_custom_call.1} parent=47 // pred_region
          %350 = dma.done [#allocation12], 64
        $region72: #{tpu_custom_call.1} parent=47 // pred_fallthru
          _
        %s351 = sand.u32 %s35, 1
        %s352 = scalar_lea.sflag [#allocation3], %s351
        %s353 = sand.u32 %s35, 1
        %s354 = smul.addr %s353, 64
        %s355 = scalar_lea.vmem [#allocation2], %s354
        %p356 = pneg %p48
        %p357 = pneg %p45
        %p358 = pneg %p69
        %p359 = pneg %p66
        %p360 = pneg %p90
        %p361 = pneg %p87
        %p362 = pneg %p111
        %p363 = pneg %p108
        %p364 = pneg %p132
        %p365 = pneg %p129
        %p366 = pneg %p153
        %p367 = pneg %p150
        %p368 = pneg %p174
        %p369 = pneg %p171
        %p370 = pneg %p200
        %p371 = pneg %p197
        %s372 = sand.u32 %s187, 1
        %s373 = scalar_lea.sflag [#allocation4], %s372
        %s374 = sand.u32 %s187, 1
        %s375 = smul.addr %s374, 64
        %s376 = scalar_lea.vmem [#allocation13], %s375
        %s377 = smul.u32 2, %s27
        %s378 = smul.u32 2, %s27
        %v379 = vld [vmem:[%s320] sm:$0xff]
        %v380 = vld [vmem:[%s320 + $0x8] sm:$0xff]
        %v381 = vld [vmem:[%s320 + $0x10] sm:$0xff]
        %v382 = vld [vmem:[%s320 + $0x18] sm:$0xff]
        %v383 = vld [vmem:[%s320 + $0x20] sm:$0xff]
        %v384 = vld [vmem:[%s320 + $0x28] sm:$0xff]
        %v385 = vld [vmem:[%s320 + $0x30] sm:$0xff]
        %v386 = vld [vmem:[%s320 + $0x38] sm:$0xff]
        %v387 = vld [vmem:[#allocation5] sm:$0xff]
        %v388 = vld [vmem:[#allocation5 + $0x8] sm:$0xff]
        %v389 = vld [vmem:[#allocation5 + $0x10] sm:$0xff]
        %v390 = vld [vmem:[#allocation5 + $0x18] sm:$0xff]
        %v391 = vld [vmem:[#allocation5 + $0x20] sm:$0xff]
        %v392 = vld [vmem:[#allocation5 + $0x28] sm:$0xff]
        %v393 = vld [vmem:[#allocation5 + $0x30] sm:$0xff]
        %v394 = vld [vmem:[#allocation5 + $0x38] sm:$0xff]
        %v395 = vld [vmem:[#allocation5 + $0x40] sm:$0xff]
        %v396 = vld [vmem:[#allocation5 + $0x48] sm:$0xff]
        %v397 = vld [vmem:[#allocation5 + $0x50] sm:$0xff]
        %v398 = vld [vmem:[#allocation5 + $0x58] sm:$0xff]
        %v399 = vld [vmem:[#allocation5 + $0x60] sm:$0xff]
        %v400 = vld [vmem:[#allocation5 + $0x68] sm:$0xff]
        %v401 = vld [vmem:[#allocation5 + $0x70] sm:$0xff]
        %v402 = vld [vmem:[#allocation5 + $0x78] sm:$0xff]
        %v403 = vld [vmem:[#allocation5 + $0x80] sm:$0xff]
        %v404 = vld [vmem:[#allocation5 + $0x88] sm:$0xff]
        %v405 = vld [vmem:[#allocation5 + $0x90] sm:$0xff]
        %v406 = vld [vmem:[#allocation5 + $0x98] sm:$0xff]
        %v407 = vld [vmem:[#allocation5 + $0xa0] sm:$0xff]
        %v408 = vld [vmem:[#allocation5 + $0xa8] sm:$0xff]
        %v409 = vld [vmem:[#allocation5 + $0xb0] sm:$0xff]
        %v410 = vld [vmem:[#allocation5 + $0xb8] sm:$0xff]
        %v411 = vld [vmem:[#allocation5 + $0xc0] sm:$0xff]
        %v412 = vld [vmem:[#allocation5 + $0xc8] sm:$0xff]
        %v413 = vld [vmem:[#allocation5 + $0xd0] sm:$0xff]
        %v414 = vld [vmem:[#allocation5 + $0xd8] sm:$0xff]
        %v415 = vld [vmem:[#allocation5 + $0xe0] sm:$0xff]
        %v416 = vld [vmem:[#allocation5 + $0xe8] sm:$0xff]
        %v417 = vld [vmem:[#allocation5 + $0xf0] sm:$0xff]
        %v418 = vld [vmem:[#allocation5 + $0xf8] sm:$0xff]
        %v419 = vld [vmem:[#allocation5 + $0x100] sm:$0xff]
        %v420 = vld [vmem:[#allocation5 + $0x108] sm:$0xff]
        %v421 = vld [vmem:[#allocation5 + $0x110] sm:$0xff]
        %v422 = vld [vmem:[#allocation5 + $0x118] sm:$0xff]
        %v423 = vld [vmem:[#allocation5 + $0x120] sm:$0xff]
        %v424 = vld [vmem:[#allocation5 + $0x128] sm:$0xff]
        %v425 = vld [vmem:[#allocation5 + $0x130] sm:$0xff]
        %v426 = vld [vmem:[#allocation5 + $0x138] sm:$0xff]
        %v427 = vld [vmem:[#allocation5 + $0x140] sm:$0xff]
        %v428 = vld [vmem:[#allocation5 + $0x148] sm:$0xff]
        %v429 = vld [vmem:[#allocation5 + $0x150] sm:$0xff]
        %v430 = vld [vmem:[#allocation5 + $0x158] sm:$0xff]
        %v431 = vld [vmem:[#allocation5 + $0x160] sm:$0xff]
        %v432 = vld [vmem:[#allocation5 + $0x168] sm:$0xff]
        %v433 = vld [vmem:[#allocation5 + $0x170] sm:$0xff]
        %v434 = vld [vmem:[#allocation5 + $0x178] sm:$0xff]
        %v435 = vld [vmem:[#allocation5 + $0x180] sm:$0xff]
        %v436 = vld [vmem:[#allocation5 + $0x188] sm:$0xff]
        %v437 = vld [vmem:[#allocation5 + $0x190] sm:$0xff]
        %v438 = vld [vmem:[#allocation5 + $0x198] sm:$0xff]
        %v439 = vld [vmem:[#allocation5 + $0x1a0] sm:$0xff]
        %v440 = vld [vmem:[#allocation5 + $0x1a8] sm:$0xff]
        %v441 = vld [vmem:[#allocation5 + $0x1b0] sm:$0xff]
        %v442 = vld [vmem:[#allocation5 + $0x1b8] sm:$0xff]
        %v443 = vld [vmem:[#allocation5 + $0x1c0] sm:$0xff]
        %v444 = vld [vmem:[#allocation5 + $0x1c8] sm:$0xff]
        %v445 = vld [vmem:[#allocation5 + $0x1d0] sm:$0xff]
        %v446 = vld [vmem:[#allocation5 + $0x1d8] sm:$0xff]
        %v447 = vld [vmem:[#allocation5 + $0x1e0] sm:$0xff]
        %v448 = vld [vmem:[#allocation5 + $0x1e8] sm:$0xff]
        %v449 = vld [vmem:[#allocation5 + $0x1f0] sm:$0xff]
        %v450 = vld [vmem:[#allocation5 + $0x1f8] sm:$0xff]
        %v451 = vld [vmem:[#allocation5 + $0x200] sm:$0xff]
        %v452 = vld [vmem:[#allocation5 + $0x208] sm:$0xff]
        %v453 = vld [vmem:[#allocation5 + $0x210] sm:$0xff]
        %v454 = vld [vmem:[#allocation5 + $0x218] sm:$0xff]
        %v455 = vld [vmem:[#allocation5 + $0x220] sm:$0xff]
        %v456 = vld [vmem:[#allocation5 + $0x228] sm:$0xff]
        %v457 = vld [vmem:[#allocation5 + $0x230] sm:$0xff]
        %v458 = vld [vmem:[#allocation5 + $0x238] sm:$0xff]
        %v459 = vld [vmem:[#allocation5 + $0x240] sm:$0xff]
        %v460 = vld [vmem:[#allocation5 + $0x248] sm:$0xff]
        %v461 = vld [vmem:[#allocation5 + $0x250] sm:$0xff]
        %v462 = vld [vmem:[#allocation5 + $0x258] sm:$0xff]
        %v463 = vld [vmem:[#allocation5 + $0x260] sm:$0xff]
        %v464 = vld [vmem:[#allocation5 + $0x268] sm:$0xff]
        %v465 = vld [vmem:[#allocation5 + $0x270] sm:$0xff]
        %v466 = vld [vmem:[#allocation5 + $0x278] sm:$0xff]
        %v467 = vld [vmem:[#allocation5 + $0x280] sm:$0xff]
        %v468 = vld [vmem:[#allocation5 + $0x288] sm:$0xff]
        %v469 = vld [vmem:[#allocation5 + $0x290] sm:$0xff]
        %v470 = vld [vmem:[#allocation5 + $0x298] sm:$0xff]
        %v471 = vld [vmem:[#allocation5 + $0x2a0] sm:$0xff]
        %v472 = vld [vmem:[#allocation5 + $0x2a8] sm:$0xff]
        %v473 = vld [vmem:[#allocation5 + $0x2b0] sm:$0xff]
        %v474 = vld [vmem:[#allocation5 + $0x2b8] sm:$0xff]
        %v475 = vld [vmem:[#allocation5 + $0x2c0] sm:$0xff]
        %v476 = vld [vmem:[#allocation5 + $0x2c8] sm:$0xff]
        %v477 = vld [vmem:[#allocation5 + $0x2d0] sm:$0xff]
        %v478 = vld [vmem:[#allocation5 + $0x2d8] sm:$0xff]
        %v479 = vld [vmem:[#allocation5 + $0x2e0] sm:$0xff]
        %v480 = vld [vmem:[#allocation5 + $0x2e8] sm:$0xff]
        %v481 = vld [vmem:[#allocation5 + $0x2f0] sm:$0xff]
        %v482 = vld [vmem:[#allocation5 + $0x2f8] sm:$0xff]
        %v483 = vld [vmem:[#allocation5 + $0x300] sm:$0xff]
        %v484 = vld [vmem:[#allocation5 + $0x308] sm:$0xff]
        %v485 = vld [vmem:[#allocation5 + $0x310] sm:$0xff]
        %v486 = vld [vmem:[#allocation5 + $0x318] sm:$0xff]
        %v487 = vld [vmem:[#allocation5 + $0x320] sm:$0xff]
        %v488 = vld [vmem:[#allocation5 + $0x328] sm:$0xff]
        %v489 = vld [vmem:[#allocation5 + $0x330] sm:$0xff]
        %v490 = vld [vmem:[#allocation5 + $0x338] sm:$0xff]
        %v491 = vld [vmem:[#allocation5 + $0x340] sm:$0xff]
        %v492 = vld [vmem:[#allocation5 + $0x348] sm:$0xff]
        %v493 = vld [vmem:[#allocation5 + $0x350] sm:$0xff]
        %v494 = vld [vmem:[#allocation5 + $0x358] sm:$0xff]
        %v495 = vld [vmem:[#allocation5 + $0x360] sm:$0xff]
        %v496 = vld [vmem:[#allocation5 + $0x368] sm:$0xff]
        %v497 = vld [vmem:[#allocation5 + $0x370] sm:$0xff]
        %v498 = vld [vmem:[#allocation5 + $0x378] sm:$0xff]
        %v499 = vld [vmem:[#allocation5 + $0x380] sm:$0xff]
        %v500 = vld [vmem:[#allocation5 + $0x388] sm:$0xff]
        %v501 = vld [vmem:[#allocation5 + $0x390] sm:$0xff]
        %v502 = vld [vmem:[#allocation5 + $0x398] sm:$0xff]
        %v503 = vld [vmem:[#allocation5 + $0x3a0] sm:$0xff]
        %v504 = vld [vmem:[#allocation5 + $0x3a8] sm:$0xff]
        %v505 = vld [vmem:[#allocation5 + $0x3b0] sm:$0xff]
        %v506 = vld [vmem:[#allocation5 + $0x3b8] sm:$0xff]
        %v507 = vld [vmem:[#allocation5 + $0x3c0] sm:$0xff]
        %v508 = vld [vmem:[#allocation5 + $0x3c8] sm:$0xff]
        %v509 = vld [vmem:[#allocation5 + $0x3d0] sm:$0xff]
        %v510 = vld [vmem:[#allocation5 + $0x3d8] sm:$0xff]
        %v511 = vld [vmem:[#allocation5 + $0x3e0] sm:$0xff]
        %v512 = vld [vmem:[#allocation5 + $0x3e8] sm:$0xff]
        %v513 = vld [vmem:[#allocation5 + $0x3f0] sm:$0xff]
        %v514 = vld [vmem:[#allocation5 + $0x3f8] sm:$0xff]
        %v515 = vld [vmem:[#allocation7] sm:$0x3]
        %v517 = vperm.slane %v515, 0
        %v518 = vperm.slane %v515, 1
        %521 = vmatpush.msra.mxu0 %v417
        %522 = vmatpush.msra.mxu0 %v415
        %523 = vmatpush.msra.mxu0 %v413
        %524 = vmatpush.msra.mxu0 %v411
        %525 = vmatpush.msra.mxu0 %v409
        %526 = vmatpush.msra.mxu0 %v407
        %527 = vmatpush.msra.mxu0 %v405
        %528 = vmatpush.msra.mxu0 %v403
        %529 = vmatpush.msra.mxu0 %v401
        %530 = vmatpush.msra.mxu0 %v399
        %531 = vmatpush.msra.mxu0 %v397
        %532 = vmatpush.msra.mxu0 %v395
        %533 = vmatpush.msra.mxu0 %v393
        %534 = vmatpush.msra.mxu0 %v391
        %535 = vmatpush.msra.mxu0 %v389
        %536 = vmatpush.msra.mxu0 %v387
        %537 = vmatmul.f32.gmra.mxu0 %v379
        %v538 = vpop.f32.mrf.mxu0
        %v539 = vadd.f32 %v517, %v538
        %540 = vmatmul.f32.gmra.mxu0 %v383
        %v541 = vpop.f32.mrf.mxu0
        %v542 = vadd.f32 %v517, %v541
        %543 = vdwg.mxu0
        %544 = vmatpush.msra.mxu0 %v449
        %545 = vmatpush.msra.mxu0 %v447
        %546 = vmatpush.msra.mxu0 %v445
        %547 = vmatpush.msra.mxu0 %v443
        %548 = vmatpush.msra.mxu0 %v441
        %549 = vmatpush.msra.mxu0 %v439
        %550 = vmatpush.msra.mxu0 %v437
        %551 = vmatpush.msra.mxu0 %v435
        %552 = vmatpush.msra.mxu0 %v433
        %553 = vmatpush.msra.mxu0 %v431
        %554 = vmatpush.msra.mxu0 %v429
        %555 = vmatpush.msra.mxu0 %v427
        %556 = vmatpush.msra.mxu0 %v425
        %557 = vmatpush.msra.mxu0 %v423
        %558 = vmatpush.msra.mxu0 %v421
        %559 = vmatpush.msra.mxu0 %v419
        %560 = vmatmul.f32.gmra.mxu0 %v380
        %v561 = vpop.f32.mrf.mxu0
        %v562 = vadd.f32 %v539, %v561
        %563 = vmatmul.f32.gmra.mxu0 %v384
        %v564 = vpop.f32.mrf.mxu0
        %v565 = vadd.f32 %v542, %v564
        %566 = vdwg.mxu0
        %567 = vmatpush.msra.mxu0 %v481
        %568 = vmatpush.msra.mxu0 %v479
        %569 = vmatpush.msra.mxu0 %v477
        %570 = vmatpush.msra.mxu0 %v475
        %571 = vmatpush.msra.mxu0 %v473
        %572 = vmatpush.msra.mxu0 %v471
        %573 = vmatpush.msra.mxu0 %v469
        %574 = vmatpush.msra.mxu0 %v467
        %575 = vmatpush.msra.mxu0 %v465
        %576 = vmatpush.msra.mxu0 %v463
        %577 = vmatpush.msra.mxu0 %v461
        %578 = vmatpush.msra.mxu0 %v459
        %579 = vmatpush.msra.mxu0 %v457
        %580 = vmatpush.msra.mxu0 %v455
        %581 = vmatpush.msra.mxu0 %v453
        %582 = vmatpush.msra.mxu0 %v451
        %583 = vmatmul.f32.gmra.mxu0 %v381
        %v584 = vpop.f32.mrf.mxu0
        %v585 = vadd.f32 %v562, %v584
        %586 = vmatmul.f32.gmra.mxu0 %v385
        %v587 = vpop.f32.mrf.mxu0
        %v588 = vadd.f32 %v565, %v587
        %589 = vdwg.mxu0
        %590 = vmatpush.msra.mxu0 %v513
        %591 = vmatpush.msra.mxu0 %v511
        %592 = vmatpush.msra.mxu0 %v509
        %593 = vmatpush.msra.mxu0 %v507
        %594 = vmatpush.msra.mxu0 %v505
        %595 = vmatpush.msra.mxu0 %v503
        %596 = vmatpush.msra.mxu0 %v501
        %597 = vmatpush.msra.mxu0 %v499
        %598 = vmatpush.msra.mxu0 %v497
        %599 = vmatpush.msra.mxu0 %v495
        %600 = vmatpush.msra.mxu0 %v493
        %601 = vmatpush.msra.mxu0 %v491
        %602 = vmatpush.msra.mxu0 %v489
        %603 = vmatpush.msra.mxu0 %v487
        %604 = vmatpush.msra.mxu0 %v485
        %605 = vmatpush.msra.mxu0 %v483
        %606 = vmatmul.f32.gmra.mxu0 %v382
        %v607 = vpop.f32.mrf.mxu0
        %v608 = vadd.f32 %v585, %v607
        %609 = vmatmul.f32.gmra.mxu0 %v386
        %v610 = vpop.f32.mrf.mxu0
        %v611 = vadd.f32 %v588, %v610
        %612 = vdwg.mxu0
        %613 = vmatpush.msra.mxu0 %v418
        %614 = vmatpush.msra.mxu0 %v416
        %615 = vmatpush.msra.mxu0 %v414
        %616 = vmatpush.msra.mxu0 %v412
        %617 = vmatpush.msra.mxu0 %v410
        %618 = vmatpush.msra.mxu0 %v408
        %619 = vmatpush.msra.mxu0 %v406
        %620 = vmatpush.msra.mxu0 %v404
        %621 = vmatpush.msra.mxu0 %v402
        %622 = vmatpush.msra.mxu0 %v400
        %623 = vmatpush.msra.mxu0 %v398
        %624 = vmatpush.msra.mxu0 %v396
        %625 = vmatpush.msra.mxu0 %v394
        %626 = vmatpush.msra.mxu0 %v392
        %627 = vmatpush.msra.mxu0 %v390
        %628 = vmatpush.msra.mxu0 %v388
        %629 = vmatmul.f32.gmra.mxu0 %v379
        %v630 = vpop.f32.mrf.mxu0
        %v631 = vadd.f32 %v518, %v630
        %632 = vmatmul.f32.gmra.mxu0 %v383
        %v633 = vpop.f32.mrf.mxu0
        %v634 = vadd.f32 %v518, %v633
        %635 = vdwg.mxu0
        %636 = vmatpush.msra.mxu0 %v450
        %637 = vmatpush.msra.mxu0 %v448
        %638 = vmatpush.msra.mxu0 %v446
        %639 = vmatpush.msra.mxu0 %v444
        %640 = vmatpush.msra.mxu0 %v442
        %641 = vmatpush.msra.mxu0 %v440
        %642 = vmatpush.msra.mxu0 %v438
        %643 = vmatpush.msra.mxu0 %v436
        %644 = vmatpush.msra.mxu0 %v434
        %645 = vmatpush.msra.mxu0 %v432
        %646 = vmatpush.msra.mxu0 %v430
        %647 = vmatpush.msra.mxu0 %v428
        %648 = vmatpush.msra.mxu0 %v426
        %649 = vmatpush.msra.mxu0 %v424
        %650 = vmatpush.msra.mxu0 %v422
        %651 = vmatpush.msra.mxu0 %v420
        %652 = vmatmul.f32.gmra.mxu0 %v380
        %v653 = vpop.f32.mrf.mxu0
        %v654 = vadd.f32 %v631, %v653
        %655 = vmatmul.f32.gmra.mxu0 %v384
        %v656 = vpop.f32.mrf.mxu0
        %v657 = vadd.f32 %v634, %v656
        %658 = vdwg.mxu0
        %659 = vmatpush.msra.mxu0 %v482
        %660 = vmatpush.msra.mxu0 %v480
        %661 = vmatpush.msra.mxu0 %v478
        %662 = vmatpush.msra.mxu0 %v476
        %663 = vmatpush.msra.mxu0 %v474
        %664 = vmatpush.msra.mxu0 %v472
        %665 = vmatpush.msra.mxu0 %v470
        %666 = vmatpush.msra.mxu0 %v468
        %667 = vmatpush.msra.mxu0 %v466
        %668 = vmatpush.msra.mxu0 %v464
        %669 = vmatpush.msra.mxu0 %v462
        %670 = vmatpush.msra.mxu0 %v460
        %671 = vmatpush.msra.mxu0 %v458
        %672 = vmatpush.msra.mxu0 %v456
        %673 = vmatpush.msra.mxu0 %v454
        %674 = vmatpush.msra.mxu0 %v452
        %675 = vmatmul.f32.gmra.mxu0 %v381
        %v676 = vpop.f32.mrf.mxu0
        %v677 = vadd.f32 %v654, %v676
        %678 = vmatmul.f32.gmra.mxu0 %v385
        %v679 = vpop.f32.mrf.mxu0
        %v680 = vadd.f32 %v657, %v679
        %681 = vdwg.mxu0
        %682 = vmatpush.msra.mxu0 %v514
        %683 = vmatpush.msra.mxu0 %v512
        %684 = vmatpush.msra.mxu0 %v510
        %685 = vmatpush.msra.mxu0 %v508
        %686 = vmatpush.msra.mxu0 %v506
        %687 = vmatpush.msra.mxu0 %v504
        %688 = vmatpush.msra.mxu0 %v502
        %689 = vmatpush.msra.mxu0 %v500
        %690 = vmatpush.msra.mxu0 %v498
        %691 = vmatpush.msra.mxu0 %v496
        %692 = vmatpush.msra.mxu0 %v494
        %693 = vmatpush.msra.mxu0 %v492
        %694 = vmatpush.msra.mxu0 %v490
        %695 = vmatpush.msra.mxu0 %v488
        %696 = vmatpush.msra.mxu0 %v486
        %697 = vmatpush.msra.mxu0 %v484
        %698 = vmatmul.f32.gmra.mxu0 %v382
        %v699 = vpop.f32.mrf.mxu0
        %v700 = vadd.f32 %v677, %v699
        %701 = vmatmul.f32.gmra.mxu0 %v386
        %v702 = vpop.f32.mrf.mxu0
        %v703 = vadd.f32 %v680, %v702
        %704 = vdwg.mxu0
        %v705 = vmax.f32 %v608, 0.0
        %v706 = vmax.f32 %v700, 0.0
        %v707 = vmax.f32 %v611, 0.0
        %v708 = vmax.f32 %v703, 0.0
        %v709 = vld [vmem:[#allocation8] sm:$0xff]
        %v710 = vld [vmem:[#allocation8 + $0x8] sm:$0xff]
        %v711 = vld [vmem:[#allocation8 + $0x10] sm:$0xff]
        %v712 = vld [vmem:[#allocation8 + $0x18] sm:$0xff]
        %v713 = vld [vmem:[#allocation8 + $0x20] sm:$0xff]
        %v714 = vld [vmem:[#allocation8 + $0x28] sm:$0xff]
        %v715 = vld [vmem:[#allocation8 + $0x30] sm:$0xff]
        %v716 = vld [vmem:[#allocation8 + $0x38] sm:$0xff]
        %v717 = vld [vmem:[#allocation8 + $0x40] sm:$0xff]
        %v718 = vld [vmem:[#allocation8 + $0x48] sm:$0xff]
        %v719 = vld [vmem:[#allocation8 + $0x50] sm:$0xff]
        %v720 = vld [vmem:[#allocation8 + $0x58] sm:$0xff]
        %v721 = vld [vmem:[#allocation8 + $0x60] sm:$0xff]
        %v722 = vld [vmem:[#allocation8 + $0x68] sm:$0xff]
        %v723 = vld [vmem:[#allocation8 + $0x70] sm:$0xff]
        %v724 = vld [vmem:[#allocation8 + $0x78] sm:$0xff]
        %v725 = vld [vmem:[#allocation8 + $0x80] sm:$0xff]
        %v726 = vld [vmem:[#allocation8 + $0x88] sm:$0xff]
        %v727 = vld [vmem:[#allocation8 + $0x90] sm:$0xff]
        %v728 = vld [vmem:[#allocation8 + $0x98] sm:$0xff]
        %v729 = vld [vmem:[#allocation8 + $0xa0] sm:$0xff]
        %v730 = vld [vmem:[#allocation8 + $0xa8] sm:$0xff]
        %v731 = vld [vmem:[#allocation8 + $0xb0] sm:$0xff]
        %v732 = vld [vmem:[#allocation8 + $0xb8] sm:$0xff]
        %v733 = vld [vmem:[#allocation8 + $0xc0] sm:$0xff]
        %v734 = vld [vmem:[#allocation8 + $0xc8] sm:$0xff]
        %v735 = vld [vmem:[#allocation8 + $0xd0] sm:$0xff]
        %v736 = vld [vmem:[#allocation8 + $0xd8] sm:$0xff]
        %v737 = vld [vmem:[#allocation8 + $0xe0] sm:$0xff]
        %v738 = vld [vmem:[#allocation8 + $0xe8] sm:$0xff]
        %v739 = vld [vmem:[#allocation8 + $0xf0] sm:$0xff]
        %v740 = vld [vmem:[#allocation8 + $0xf8] sm:$0xff]
        %v741 = vld [vmem:[#allocation8 + $0x100] sm:$0xff]
        %v742 = vld [vmem:[#allocation8 + $0x108] sm:$0xff]
        %v743 = vld [vmem:[#allocation8 + $0x110] sm:$0xff]
        %v744 = vld [vmem:[#allocation8 + $0x118] sm:$0xff]
        %v745 = vld [vmem:[#allocation8 + $0x120] sm:$0xff]
        %v746 = vld [vmem:[#allocation8 + $0x128] sm:$0xff]
        %v747 = vld [vmem:[#allocation8 + $0x130] sm:$0xff]
        %v748 = vld [vmem:[#allocation8 + $0x138] sm:$0xff]
        %v749 = vld [vmem:[#allocation8 + $0x140] sm:$0xff]
        %v750 = vld [vmem:[#allocation8 + $0x148] sm:$0xff]
        %v751 = vld [vmem:[#allocation8 + $0x150] sm:$0xff]
        %v752 = vld [vmem:[#allocation8 + $0x158] sm:$0xff]
        %v753 = vld [vmem:[#allocation8 + $0x160] sm:$0xff]
        %v754 = vld [vmem:[#allocation8 + $0x168] sm:$0xff]
        %v755 = vld [vmem:[#allocation8 + $0x170] sm:$0xff]
        %v756 = vld [vmem:[#allocation8 + $0x178] sm:$0xff]
        %v757 = vld [vmem:[#allocation8 + $0x180] sm:$0xff]
        %v758 = vld [vmem:[#allocation8 + $0x188] sm:$0xff]
        %v759 = vld [vmem:[#allocation8 + $0x190] sm:$0xff]
        %v760 = vld [vmem:[#allocation8 + $0x198] sm:$0xff]
        %v761 = vld [vmem:[#allocation8 + $0x1a0] sm:$0xff]
        %v762 = vld [vmem:[#allocation8 + $0x1a8] sm:$0xff]
        %v763 = vld [vmem:[#allocation8 + $0x1b0] sm:$0xff]
        %v764 = vld [vmem:[#allocation8 + $0x1b8] sm:$0xff]
        %v765 = vld [vmem:[#allocation8 + $0x1c0] sm:$0xff]
        %v766 = vld [vmem:[#allocation8 + $0x1c8] sm:$0xff]
        %v767 = vld [vmem:[#allocation8 + $0x1d0] sm:$0xff]
        %v768 = vld [vmem:[#allocation8 + $0x1d8] sm:$0xff]
        %v769 = vld [vmem:[#allocation8 + $0x1e0] sm:$0xff]
        %v770 = vld [vmem:[#allocation8 + $0x1e8] sm:$0xff]
        %v771 = vld [vmem:[#allocation8 + $0x1f0] sm:$0xff]
        %v772 = vld [vmem:[#allocation8 + $0x1f8] sm:$0xff]
        %v773 = vld [vmem:[#allocation8 + $0x200] sm:$0xff]
        %v774 = vld [vmem:[#allocation8 + $0x208] sm:$0xff]
        %v775 = vld [vmem:[#allocation8 + $0x210] sm:$0xff]
        %v776 = vld [vmem:[#allocation8 + $0x218] sm:$0xff]
        %v777 = vld [vmem:[#allocation8 + $0x220] sm:$0xff]
        %v778 = vld [vmem:[#allocation8 + $0x228] sm:$0xff]
        %v779 = vld [vmem:[#allocation8 + $0x230] sm:$0xff]
        %v780 = vld [vmem:[#allocation8 + $0x238] sm:$0xff]
        %v781 = vld [vmem:[#allocation8 + $0x240] sm:$0xff]
        %v782 = vld [vmem:[#allocation8 + $0x248] sm:$0xff]
        %v783 = vld [vmem:[#allocation8 + $0x250] sm:$0xff]
        %v784 = vld [vmem:[#allocation8 + $0x258] sm:$0xff]
        %v785 = vld [vmem:[#allocation8 + $0x260] sm:$0xff]
        %v786 = vld [vmem:[#allocation8 + $0x268] sm:$0xff]
        %v787 = vld [vmem:[#allocation8 + $0x270] sm:$0xff]
        %v788 = vld [vmem:[#allocation8 + $0x278] sm:$0xff]
        %v789 = vld [vmem:[#allocation8 + $0x280] sm:$0xff]
        %v790 = vld [vmem:[#allocation8 + $0x288] sm:$0xff]
        %v791 = vld [vmem:[#allocation8 + $0x290] sm:$0xff]
        %v792 = vld [vmem:[#allocation8 + $0x298] sm:$0xff]
        %v793 = vld [vmem:[#allocation8 + $0x2a0] sm:$0xff]
        %v794 = vld [vmem:[#allocation8 + $0x2a8] sm:$0xff]
        %v795 = vld [vmem:[#allocation8 + $0x2b0] sm:$0xff]
        %v796 = vld [vmem:[#allocation8 + $0x2b8] sm:$0xff]
        %v797 = vld [vmem:[#allocation8 + $0x2c0] sm:$0xff]
        %v798 = vld [vmem:[#allocation8 + $0x2c8] sm:$0xff]
        %v799 = vld [vmem:[#allocation8 + $0x2d0] sm:$0xff]
        %v800 = vld [vmem:[#allocation8 + $0x2d8] sm:$0xff]
        %v801 = vld [vmem:[#allocation8 + $0x2e0] sm:$0xff]
        %v802 = vld [vmem:[#allocation8 + $0x2e8] sm:$0xff]
        %v803 = vld [vmem:[#allocation8 + $0x2f0] sm:$0xff]
        %v804 = vld [vmem:[#allocation8 + $0x2f8] sm:$0xff]
        %v805 = vld [vmem:[#allocation8 + $0x300] sm:$0xff]
        %v806 = vld [vmem:[#allocation8 + $0x308] sm:$0xff]
        %v807 = vld [vmem:[#allocation8 + $0x310] sm:$0xff]
        %v808 = vld [vmem:[#allocation8 + $0x318] sm:$0xff]
        %v809 = vld [vmem:[#allocation8 + $0x320] sm:$0xff]
        %v810 = vld [vmem:[#allocation8 + $0x328] sm:$0xff]
        %v811 = vld [vmem:[#allocation8 + $0x330] sm:$0xff]
        %v812 = vld [vmem:[#allocation8 + $0x338] sm:$0xff]
        %v813 = vld [vmem:[#allocation8 + $0x340] sm:$0xff]
        %v814 = vld [vmem:[#allocation8 + $0x348] sm:$0xff]
        %v815 = vld [vmem:[#allocation8 + $0x350] sm:$0xff]
        %v816 = vld [vmem:[#allocation8 + $0x358] sm:$0xff]
        %v817 = vld [vmem:[#allocation8 + $0x360] sm:$0xff]
        %v818 = vld [vmem:[#allocation8 + $0x368] sm:$0xff]
        %v819 = vld [vmem:[#allocation8 + $0x370] sm:$0xff]
        %v820 = vld [vmem:[#allocation8 + $0x378] sm:$0xff]
        %v821 = vld [vmem:[#allocation8 + $0x380] sm:$0xff]
        %v822 = vld [vmem:[#allocation8 + $0x388] sm:$0xff]
        %v823 = vld [vmem:[#allocation8 + $0x390] sm:$0xff]
        %v824 = vld [vmem:[#allocation8 + $0x398] sm:$0xff]
        %v825 = vld [vmem:[#allocation8 + $0x3a0] sm:$0xff]
        %v826 = vld [vmem:[#allocation8 + $0x3a8] sm:$0xff]
        %v827 = vld [vmem:[#allocation8 + $0x3b0] sm:$0xff]
        %v828 = vld [vmem:[#allocation8 + $0x3b8] sm:$0xff]
        %v829 = vld [vmem:[#allocation8 + $0x3c0] sm:$0xff]
        %v830 = vld [vmem:[#allocation8 + $0x3c8] sm:$0xff]
        %v831 = vld [vmem:[#allocation8 + $0x3d0] sm:$0xff]
        %v832 = vld [vmem:[#allocation8 + $0x3d8] sm:$0xff]
        %v833 = vld [vmem:[#allocation8 + $0x3e0] sm:$0xff]
        %v834 = vld [vmem:[#allocation8 + $0x3e8] sm:$0xff]
        %v835 = vld [vmem:[#allocation8 + $0x3f0] sm:$0xff]
        %v836 = vld [vmem:[#allocation8 + $0x3f8] sm:$0xff]
        %v837 = vld [vmem:[#allocation10] sm:$0xf]
        %v839 = vperm.slane %v837, 0
        %v840 = vperm.slane %v837, 1
        %v841 = vperm.slane %v837, 2
        %v842 = vperm.slane %v837, 3
        %847 = vmatpush.msra.mxu0 %v769
        %848 = vmatpush.msra.mxu0 %v765
        %849 = vmatpush.msra.mxu0 %v761
        %850 = vmatpush.msra.mxu0 %v757
        %851 = vmatpush.msra.mxu0 %v753
        %852 = vmatpush.msra.mxu0 %v749
        %853 = vmatpush.msra.mxu0 %v745
        %854 = vmatpush.msra.mxu0 %v741
        %855 = vmatpush.msra.mxu0 %v737
        %856 = vmatpush.msra.mxu0 %v733
        %857 = vmatpush.msra.mxu0 %v729
        %858 = vmatpush.msra.mxu0 %v725
        %859 = vmatpush.msra.mxu0 %v721
        %860 = vmatpush.msra.mxu0 %v717
        %861 = vmatpush.msra.mxu0 %v713
        %862 = vmatpush.msra.mxu0 %v709
        %863 = vmatmul.f32.gmra.mxu0 %v705
        %v864 = vpop.f32.mrf.mxu0
        %v865 = vadd.f32 %v839, %v864
        %866 = vmatmul.f32.gmra.mxu0 %v707
        %v867 = vpop.f32.mrf.mxu0
        %v868 = vadd.f32 %v839, %v867
        %869 = vdwg.mxu0
        %870 = vmatpush.msra.mxu0 %v833
        %871 = vmatpush.msra.mxu0 %v829
        %872 = vmatpush.msra.mxu0 %v825
        %873 = vmatpush.msra.mxu0 %v821
        %874 = vmatpush.msra.mxu0 %v817
        %875 = vmatpush.msra.mxu0 %v813
        %876 = vmatpush.msra.mxu0 %v809
        %877 = vmatpush.msra.mxu0 %v805
        %878 = vmatpush.msra.mxu0 %v801
        %879 = vmatpush.msra.mxu0 %v797
        %880 = vmatpush.msra.mxu0 %v793
        %881 = vmatpush.msra.mxu0 %v789
        %882 = vmatpush.msra.mxu0 %v785
        %883 = vmatpush.msra.mxu0 %v781
        %884 = vmatpush.msra.mxu0 %v777
        %885 = vmatpush.msra.mxu0 %v773
        %886 = vmatmul.f32.gmra.mxu0 %v706
        %v887 = vpop.f32.mrf.mxu0
        %v888 = vadd.f32 %v865, %v887
        %889 = vmatmul.f32.gmra.mxu0 %v708
        %v890 = vpop.f32.mrf.mxu0
        %v891 = vadd.f32 %v868, %v890
        %892 = vdwg.mxu0
        %893 = vmatpush.msra.mxu0 %v770
        %894 = vmatpush.msra.mxu0 %v766
        %895 = vmatpush.msra.mxu0 %v762
        %896 = vmatpush.msra.mxu0 %v758
        %897 = vmatpush.msra.mxu0 %v754
        %898 = vmatpush.msra.mxu0 %v750
        %899 = vmatpush.msra.mxu0 %v746
        %900 = vmatpush.msra.mxu0 %v742
        %901 = vmatpush.msra.mxu0 %v738
        %902 = vmatpush.msra.mxu0 %v734
        %903 = vmatpush.msra.mxu0 %v730
        %904 = vmatpush.msra.mxu0 %v726
        %905 = vmatpush.msra.mxu0 %v722
        %906 = vmatpush.msra.mxu0 %v718
        %907 = vmatpush.msra.mxu0 %v714
        %908 = vmatpush.msra.mxu0 %v710
        %909 = vmatmul.f32.gmra.mxu0 %v705
        %v910 = vpop.f32.mrf.mxu0
        %v911 = vadd.f32 %v840, %v910
        %912 = vmatmul.f32.gmra.mxu0 %v707
        %v913 = vpop.f32.mrf.mxu0
        %v914 = vadd.f32 %v840, %v913
        %915 = vdwg.mxu0
        %916 = vmatpush.msra.mxu0 %v834
        %917 = vmatpush.msra.mxu0 %v830
        %918 = vmatpush.msra.mxu0 %v826
        %919 = vmatpush.msra.mxu0 %v822
        %920 = vmatpush.msra.mxu0 %v818
        %921 = vmatpush.msra.mxu0 %v814
        %922 = vmatpush.msra.mxu0 %v810
        %923 = vmatpush.msra.mxu0 %v806
        %924 = vmatpush.msra.mxu0 %v802
        %925 = vmatpush.msra.mxu0 %v798
        %926 = vmatpush.msra.mxu0 %v794
        %927 = vmatpush.msra.mxu0 %v790
        %928 = vmatpush.msra.mxu0 %v786
        %929 = vmatpush.msra.mxu0 %v782
        %930 = vmatpush.msra.mxu0 %v778
        %931 = vmatpush.msra.mxu0 %v774
        %932 = vmatmul.f32.gmra.mxu0 %v706
        %v933 = vpop.f32.mrf.mxu0
        %v934 = vadd.f32 %v911, %v933
        %935 = vmatmul.f32.gmra.mxu0 %v708
        %v936 = vpop.f32.mrf.mxu0
        %v937 = vadd.f32 %v914, %v936
        %938 = vdwg.mxu0
        %939 = vmatpush.msra.mxu0 %v771
        %940 = vmatpush.msra.mxu0 %v767
        %941 = vmatpush.msra.mxu0 %v763
        %942 = vmatpush.msra.mxu0 %v759
        %943 = vmatpush.msra.mxu0 %v755
        %944 = vmatpush.msra.mxu0 %v751
        %945 = vmatpush.msra.mxu0 %v747
        %946 = vmatpush.msra.mxu0 %v743
        %947 = vmatpush.msra.mxu0 %v739
        %948 = vmatpush.msra.mxu0 %v735
        %949 = vmatpush.msra.mxu0 %v731
        %950 = vmatpush.msra.mxu0 %v727
        %951 = vmatpush.msra.mxu0 %v723
        %952 = vmatpush.msra.mxu0 %v719
        %953 = vmatpush.msra.mxu0 %v715
        %954 = vmatpush.msra.mxu0 %v711
        %955 = vmatmul.f32.gmra.mxu0 %v705
        %v956 = vpop.f32.mrf.mxu0
        %v957 = vadd.f32 %v841, %v956
        %958 = vmatmul.f32.gmra.mxu0 %v707
        %v959 = vpop.f32.mrf.mxu0
        %v960 = vadd.f32 %v841, %v959
        %961 = vdwg.mxu0
        %962 = vmatpush.msra.mxu0 %v835
        %963 = vmatpush.msra.mxu0 %v831
        %964 = vmatpush.msra.mxu0 %v827
        %965 = vmatpush.msra.mxu0 %v823
        %966 = vmatpush.msra.mxu0 %v819
        %967 = vmatpush.msra.mxu0 %v815
        %968 = vmatpush.msra.mxu0 %v811
        %969 = vmatpush.msra.mxu0 %v807
        %970 = vmatpush.msra.mxu0 %v803
        %971 = vmatpush.msra.mxu0 %v799
        %972 = vmatpush.msra.mxu0 %v795
        %973 = vmatpush.msra.mxu0 %v791
        %974 = vmatpush.msra.mxu0 %v787
        %975 = vmatpush.msra.mxu0 %v783
        %976 = vmatpush.msra.mxu0 %v779
        %977 = vmatpush.msra.mxu0 %v775
        %978 = vmatmul.f32.gmra.mxu0 %v706
        %v979 = vpop.f32.mrf.mxu0
        %v980 = vadd.f32 %v957, %v979
        %981 = vmatmul.f32.gmra.mxu0 %v708
        %v982 = vpop.f32.mrf.mxu0
        %v983 = vadd.f32 %v960, %v982
        %984 = vdwg.mxu0
        %985 = vmatpush.msra.mxu0 %v772
        %986 = vmatpush.msra.mxu0 %v768
        %987 = vmatpush.msra.mxu0 %v764
        %988 = vmatpush.msra.mxu0 %v760
        %989 = vmatpush.msra.mxu0 %v756
        %990 = vmatpush.msra.mxu0 %v752
        %991 = vmatpush.msra.mxu0 %v748
        %992 = vmatpush.msra.mxu0 %v744
        %993 = vmatpush.msra.mxu0 %v740
        %994 = vmatpush.msra.mxu0 %v736
        %995 = vmatpush.msra.mxu0 %v732
        %996 = vmatpush.msra.mxu0 %v728
        %997 = vmatpush.msra.mxu0 %v724
        %998 = vmatpush.msra.mxu0 %v720
        %999 = vmatpush.msra.mxu0 %v716
        %1000 = vmatpush.msra.mxu0 %v712
        %1001 = vmatmul.f32.gmra.mxu0 %v705
        %v1002 = vpop.f32.mrf.mxu0
        %v1003 = vadd.f32 %v842, %v1002
        %1004 = vmatmul.f32.gmra.mxu0 %v707
        %v1005 = vpop.f32.mrf.mxu0
        %v1006 = vadd.f32 %v842, %v1005
        %1007 = vdwg.mxu0
        %1008 = vmatpush.msra.mxu0 %v836
        %1009 = vmatpush.msra.mxu0 %v832
        %1010 = vmatpush.msra.mxu0 %v828
        %1011 = vmatpush.msra.mxu0 %v824
        %1012 = vmatpush.msra.mxu0 %v820
        %1013 = vmatpush.msra.mxu0 %v816
        %1014 = vmatpush.msra.mxu0 %v812
        %1015 = vmatpush.msra.mxu0 %v808
        %1016 = vmatpush.msra.mxu0 %v804
        %1017 = vmatpush.msra.mxu0 %v800
        %1018 = vmatpush.msra.mxu0 %v796
        %1019 = vmatpush.msra.mxu0 %v792
        %1020 = vmatpush.msra.mxu0 %v788
        %1021 = vmatpush.msra.mxu0 %v784
        %1022 = vmatpush.msra.mxu0 %v780
        %1023 = vmatpush.msra.mxu0 %v776
        %1024 = vmatmul.f32.gmra.mxu0 %v706
        %v1025 = vpop.f32.mrf.mxu0
        %v1026 = vadd.f32 %v1003, %v1025
        %1027 = vmatmul.f32.gmra.mxu0 %v708
        %v1028 = vpop.f32.mrf.mxu0
        %v1029 = vadd.f32 %v1006, %v1028
        %1030 = vdwg.mxu0
        %v1031 = vadd.f32 %v379, %v888
        %v1032 = vadd.f32 %v380, %v934
        %v1033 = vadd.f32 %v381, %v980
        %v1034 = vadd.f32 %v382, %v1026
        %v1035 = vadd.f32 %v383, %v891
        %v1036 = vadd.f32 %v384, %v937
        %v1037 = vadd.f32 %v385, %v983
        %v1038 = vadd.f32 %v386, %v1029
        %v1039 = vadd.f32 %v1031, %v1032
        %v1040 = vadd.f32 %v1039, %v1033
        %v1041 = vadd.f32 %v1040, %v1034
        %1042 = vadd.xlane.f32.xlu0 %v1041
        %v1043 = vpop.xlane.xlu0 %1042
        %v1044 = vadd.f32 %v1035, %v1036
        %v1045 = vadd.f32 %v1044, %v1037
        %v1046 = vadd.f32 %v1045, %v1038
        %1047 = vadd.xlane.f32.xlu0 %v1046
        %v1048 = vpop.xlane.xlu0 %1047
        %v1049 = vrcp.pop 512.0
        %v1050 = vmul.f32 512.0, %v1049
        %v1051 = vsub.f32 1.0, %v1050
        %v1052 = vmul.f32 %v1049, %v1051
        %v1053 = vadd.f32 %v1049, %v1052
        %vm1054 = vweird.f32 %v1049
        %v1055 = vsel %vm1054, %v1049, %v1053
        %v1056 = vmul.f32 %v1043, %v1055
        %v1057 = vmul.f32 %v1048, %v1055
        %v1058 = vsub.f32 %v1031, %v1056
        %v1059 = vsub.f32 %v1032, %v1056
        %v1060 = vsub.f32 %v1033, %v1056
        %v1061 = vsub.f32 %v1034, %v1056
        %v1062 = vsub.f32 %v1035, %v1057
        %v1063 = vsub.f32 %v1036, %v1057
        %v1064 = vsub.f32 %v1037, %v1057
        %v1065 = vsub.f32 %v1038, %v1057
        %v1066 = vmul.f32 %v1058, %v1058
        %v1067 = vmul.f32 %v1059, %v1059
        %v1068 = vmul.f32 %v1060, %v1060
        %v1069 = vmul.f32 %v1061, %v1061
        %v1070 = vmul.f32 %v1062, %v1062
        %v1071 = vmul.f32 %v1063, %v1063
        %v1072 = vmul.f32 %v1064, %v1064
        %v1073 = vmul.f32 %v1065, %v1065
        %v1074 = vadd.f32 %v1066, %v1067
        %v1075 = vadd.f32 %v1074, %v1068
        %v1076 = vadd.f32 %v1075, %v1069
        %1077 = vadd.xlane.f32.xlu0 %v1076
        %v1078 = vpop.xlane.xlu0 %1077
        %v1079 = vadd.f32 %v1070, %v1071
        %v1080 = vadd.f32 %v1079, %v1072
        %v1081 = vadd.f32 %v1080, %v1073
        %1082 = vadd.xlane.f32.xlu0 %v1081
        %v1083 = vpop.xlane.xlu0 %1082
        %v1084 = vmul.f32 %v1078, %v1055
        %v1085 = vmul.f32 %v1083, %v1055
        %v1086 = vadd.f32 %v1084, 1e-05
        %v1087 = vadd.f32 %v1085, 1e-05
        %v1088 = vrsqrt.pop %v1086
        %v1089 = vmul.f32 %v1088, %v1086
        %v1090 = vmul.f32 %v1089, %v1088
        %v1091 = vmul.f32 0.5, %v1090
        %v1092 = vsub.f32 1.5, %v1091
        %v1093 = vmul.f32 %v1088, %v1092
        %vm1094 = vweird.f32 %v1086
        %vm1095 = vweird.f32 %v1088
        %vm1096 = vmor %vm1094, %vm1095
        %v1097 = vsel %vm1096, %v1088, %v1093
        %v1098 = vrsqrt.pop %v1087
        %v1099 = vmul.f32 %v1098, %v1087
        %v1100 = vmul.f32 %v1099, %v1098
        %v1101 = vmul.f32 0.5, %v1100
        %v1102 = vsub.f32 1.5, %v1101
        %v1103 = vmul.f32 %v1098, %v1102
        %vm1104 = vweird.f32 %v1087
        %vm1105 = vweird.f32 %v1098
        %vm1106 = vmor %vm1104, %vm1105
        %v1107 = vsel %vm1106, %v1098, %v1103
        %v1108 = vmul.f32 %v1058, %v1097
        %v1109 = vmul.f32 %v1059, %v1097
        %v1110 = vmul.f32 %v1060, %v1097
        %v1111 = vmul.f32 %v1061, %v1097
        %v1112 = vmul.f32 %v1062, %v1107
        %v1113 = vmul.f32 %v1063, %v1107
        %v1114 = vmul.f32 %v1064, %v1107
        %v1115 = vmul.f32 %v1065, %v1107
        %v1116 = vld [vmem:[%s5] sm:$0xf]
        %v1118 = vperm.slane %v1116, 0
        %v1119 = vperm.slane %v1116, 1
        %v1120 = vperm.slane %v1116, 2
        %v1121 = vperm.slane %v1116, 3
        %v1126 = vmul.f32 %v1108, %v1118
        %v1127 = vmul.f32 %v1109, %v1119
        %v1128 = vmul.f32 %v1110, %v1120
        %v1129 = vmul.f32 %v1111, %v1121
        %v1130 = vmul.f32 %v1112, %v1118
        %v1131 = vmul.f32 %v1113, %v1119
        %v1132 = vmul.f32 %v1114, %v1120
        %v1133 = vmul.f32 %v1115, %v1121
        %v1134 = vld [vmem:[#allocation11] sm:$0xf]
        %v1136 = vperm.slane %v1134, 0
        %v1137 = vperm.slane %v1134, 1
        %v1138 = vperm.slane %v1134, 2
        %v1139 = vperm.slane %v1134, 3
        %v1144 = vadd.f32 %v1126, %v1136
        %v1145 = vadd.f32 %v1127, %v1137
        %v1146 = vadd.f32 %v1128, %v1138
        %v1147 = vadd.f32 %v1129, %v1139
        %v1148 = vadd.f32 %v1130, %v1136
        %v1149 = vadd.f32 %v1131, %v1137
        %v1150 = vadd.f32 %v1132, %v1138
        %v1151 = vadd.f32 %v1133, %v1139
        %1152 = vst [vmem:[%s376] sm:$0xff] %v1144
        %1153 = vst [vmem:[%s376 + $0x8] sm:$0xff] %v1145
        %1154 = vst [vmem:[%s376 + $0x10] sm:$0xff] %v1146
        %1155 = vst [vmem:[%s376 + $0x18] sm:$0xff] %v1147
        %1156 = vst [vmem:[%s376 + $0x20] sm:$0xff] %v1148
        %1157 = vst [vmem:[%s376 + $0x28] sm:$0xff] %v1149
        %1158 = vst [vmem:[%s376 + $0x30] sm:$0xff] %v1150
        %1159 = vst [vmem:[%s376 + $0x38] sm:$0xff] %v1151
        %s1160 = sand.u32 %s187, 1
        %s1161 = scalar_lea.sflag [#allocation4], %s1160
        %s1162 = sand.u32 %s187, 1
        %s1163 = smul.addr %s1162, 64
        %s1164 = scalar_lea.vmem [#allocation13], %s1163
        // Predicated region
        $region73: #{tpu_custom_call.1} parent=47 // pred_check
          %p1165 = pneg %p197
        $region74: #{tpu_custom_call.1} parent=47 // pred_check_branch
          %1167 = sbr.rel (%p1165) target = $region76
        $region75: #{tpu_custom_call.1} parent=47 // pred_region
          %s1168 = smul.u32 2, %s27
          %1170 = vsyncadd %s1161, 0
          %s1171 = smul.addr %s1168, 4
          %s1172 = smul.addr %s1171, 8
          %s1173 = scalar_lea.hbm %s7, %s1172
          %s1174 = sshll.u32 %s1164, 4
          %s1175 = int_to_ptr.vmem [resolvable:$true] %s1174
          %s1176 = sshll.u32 %s1173, 4
          %s1177 = int_to_ptr.hbm [resolvable:$true] %s1176
          %1182 = dma.vmem_to_hbm [thread:$0]  %s1175, 1024, %s1177, %s1161, 512, 512, 32
        $region76: #{tpu_custom_call.1} parent=47 // pred_fallthru
          _
      $region48: #{tpu_custom_call.1} parent=5 // pred_fallthru
        _
      %p1183 = scmp.le.s32.totalorder 2, %s22
      // Predicated region
      $region77: #{tpu_custom_call.1} parent=5 // pred_check
        %p1184 = pneg %p1183
      $region78: #{tpu_custom_call.1} parent=5 // pred_check_branch
        %1186 = sbr.rel (%p1184) target = $region80
      $region79: #{tpu_custom_call.1} parent=5 // pred_region
        %s1187 = ssub.s32 %s22, 2
        // Predicated region
        $region81: #{tpu_custom_call.1} parent=79 // pred_check
          %p1188 = pneg %p203
        $region82: #{tpu_custom_call.1} parent=79 // pred_check_branch
          %1190 = sbr.rel (%p1188) target = $region84
        $region83: #{tpu_custom_call.1} parent=79 // pred_region
          %s1191 = sand.u32 %s188, 1
          %s1192 = scalar_lea.sflag [#allocation4], %s1191
          %s1193 = sand.u32 %s188, 1
          %s1194 = smul.addr %s1193, 64
          %s1195 = scalar_lea.vmem [#allocation13], %s1194
          %1197 = dma.done %s1192, 1024
        $region84: #{tpu_custom_call.1} parent=79 // pred_fallthru
          _
      $region80: #{tpu_custom_call.1} parent=5 // pred_fallthru
        _
    $region6: #{tpu_custom_call.1} parent=1 // loop_footer
      %s26 = sadd.s32 1, %s22
    $region7: #{tpu_custom_call.1} parent=1 // loop_footer_branch
      %21 = sbr.rel target = $region3
    $region8: #{tpu_custom_call.1} parent=1 // loop_exit
      _
    %1198 = vsyncpa [#allocation3], 1
    %s1199 = scalar_lea.sflag [#allocation3], 1
    %1200 = vsyncpa %s1199, 1
    %1201 = vsyncpa [#allocation6], 1
    %1202 = vsyncpa [#allocation9], 1
    %1203 = vsyncpa [#allocation12], 1
    %1204 = vsyncpa [#allocation4], 1
    %s1205 = scalar_lea.sflag [#allocation4], 1
    %1206 = vsyncpa %s1205, 1

</llo_original>
